<compile_context>
chip_gen: v5e
topology: v5e:2x2
jax: 0.10.0
libtpu: 0.0.40
codegen_flags: <defaults>
</compile_context>

<pallas_src>
import jax
import jax.numpy as jnp
from jax.experimental import pallas as pl
from jax.experimental.pallas import tpu as pltpu

# ----------------------------- model hyper-params ---------------------------
PSD_POS = 1              # column of `input` holding the POS index
POS_VOCAB = 20
POS_EMB_DIM = 32         # embs['psd_target_pos_lut'].embedding_dim
ROOT_SRC_ENC_SIZE = 32   # root_src_enc_size
REL_DIM = 32             # opt.rel_dim  (self.size)

LANES = 128
FOLD = LANES // REL_DIM          # 4 logical rows folded per 128-lane row
GROUP = LANES // FOLD            # 32 one-hot lanes per folded row (>= POS_VOCAB)

# TODO(synk): opt.dropout / opt.alpha_dropout are training-time only (identity
# in eval / inference), so they are intentionally omitted from the kernel.
# TODO(synk): if the downstream consumer of root_emb tolerates bf16, switch the
# out_shape / final astype to bfloat16 to cut the largest HBM stream ~2x.


def _cdiv(a, b):
    return -(-a // b)


def _round_up(a, m):
    return _cdiv(a, m) * m


def _choose_tiling(n4):
    """Pick (tile4, steps) over folded rows.

    tile4 is a multiple of 8 (f32 sublane); padding waste is bounded by
    deriving the tile from ceil(n4/steps) (worst case ~8*steps folded rows,
    i.e. a few %), and steps is kept even when >1 so the single "parallel"
    grid axis splits evenly across v7x's two TensorCores.  At tile4=1024
    (4096 packed rows) the double-buffered VMEM working set is ~5-6 MiB,
    comfortably inside the scoped default on v5e/v6e/v7x.
    """
    MAX_TILE4 = 1024
    if n4 <= MAX_TILE4:
        return max(8, _round_up(n4, 8)), 1
    steps = _cdiv(n4, MAX_TILE4)
    if steps % 2:
        steps += 1                       # balance across 2 TCs on v7x
    tile4 = _round_up(_cdiv(n4, steps), 8)
    steps = _cdiv(n4, tile4)
    return tile4, steps


# ------------------------------- Pallas kernel ------------------------------
def _root_kernel(ids_ref, head_ref, w_ref, b_ref, o_ref):
    """One folded row-tile of relu([onehot | head] @ W_full + b) (lane-dense).

    ids_ref : (t4, FOLD) int32   POS id of each of the FOLD folded rows
    head_ref: (t4, FOLD*32) f32  folded head activations
    w_ref   : (FOLD*32 + FOLD*32, 128) bf16  [block-diag pos_lut@W_pos ; block-diag W_head]
    b_ref   : (1, 128) f32       bias tiled FOLD times (kept exact in f32)
    o_ref   : (t4, 128) f32
    """
    t4, lanes = o_ref.shape
    fold = ids_ref.shape[1]
    group = lanes // fold

    ids = ids_ref[...]                                           # (t4, fold) i32
    lane = jax.lax.broadcasted_iota(jnp.int32, (t4, lanes), 1)
    # one-hot over 128 lanes: group g hits lane g*group + id_g
    hit = lane == ids[:, 0:1]
    for g in range(1, fold):
        hit = jnp.logical_or(hit, lane == (ids[:, g:g + 1] + g * group))
    onehot = jnp.where(hit, 1.0, 0.0).astype(jnp.bfloat16)       # exact in bf16

    x = jnp.concatenate([onehot, head_ref[...].astype(jnp.bfloat16)], axis=1)
    acc = jnp.dot(x, w_ref[...], preferred_element_type=jnp.float32)
    acc = acc + b_ref[...]                                       # f32 bias, exact
    o_ref[...] = jnp.maximum(acc, 0.0).astype(o_ref.dtype)


@jax.jit
def root_mlp(pos_ids, head_emb, pos_lut, w_pos, w_head, b):
    """relu(concat([pos_lut[pos_ids], head_emb], -1) @ W + b), fused in Pallas.

    pos_ids  : (N,)  int32                 POS indices into pos_lut
    head_emb : (N, ROOT_SRC_ENC_SIZE) f32
    pos_lut  : (POS_VOCAB, POS_EMB_DIM) f32
    w_pos    : (POS_EMB_DIM, REL_DIM)   f32
    w_head   : (ROOT_SRC_ENC_SIZE, REL_DIM) f32
    b        : (1, REL_DIM) f32
    returns  : (N, REL_DIM) f32
    """
    n = pos_ids.shape[0]
    rel = w_pos.shape[1]
    head_dim = head_emb.shape[1]
    vocab = pos_lut.shape[0]
    if n == 0:                                   # empty-batch guard
        return jnp.zeros((0, rel), jnp.float32)

    assert LANES % rel == 0 and FOLD == LANES // rel
    assert vocab <= GROUP                        # one-hot group must hold the vocab
    assert head_dim * FOLD == LANES              # folded head is one full vreg wide

    # --- tiny fused / block-diagonal tables (VMEM-resident, ~70 KiB total) ---
    #   pos_lut[id] @ W_pos  ==  onehot(id) @ (pos_lut @ W_pos)
    pos_tab = pos_lut.astype(jnp.float32) @ w_pos.astype(jnp.float32)   # (V, rel)
    pos_tab = jnp.pad(pos_tab, ((0, GROUP - vocab), (0, 0)))            # (32, 32)
    eye = jnp.eye(FOLD, dtype=jnp.float32)
    w_full = jnp.concatenate(
        [jnp.kron(eye, pos_tab),                      # (128, 128) block-diag
         jnp.kron(eye, w_head.astype(jnp.float32))],  # (128, 128) block-diag
        axis=0).astype(jnp.bfloat16)                  # (256, 128)
    bias = jnp.tile(b.reshape(1, rel).astype(jnp.float32), (1, FOLD))   # (1, 128)

    # --- fold 4 rows per 128-lane row; bounded padding over the packed dim ---
    n4 = _cdiv(n, FOLD)
    tile4, steps = _choose_tiling(n4)
    n4_pad = tile4 * steps
    n_pad = n4_pad * FOLD
    pad = n_pad - n

    ids = jnp.pad(pos_ids.astype(jnp.int32), (0, pad)).reshape(n4_pad, FOLD)
    head = jnp.pad(head_emb.astype(jnp.float32), ((0, pad), (0, 0)))
    head = head.reshape(n4_pad, FOLD * head_dim)     # free contiguous reshape

    out = pl.pallas_call(
        _root_kernel,
        out_shape=jax.ShapeDtypeStruct((n4_pad, LANES), jnp.float32),
        grid_spec=pltpu.PrefetchScalarGridSpec(
            num_scalar_prefetch=0,
            grid=(steps,),
            in_specs=[
                pl.BlockSpec((tile4, FOLD), lambda i: (i, 0)),            # pos ids
                pl.BlockSpec((tile4, FOLD * head_dim), lambda i: (i, 0)),  # head (f32)
                pl.BlockSpec((FOLD * (GROUP + head_dim), LANES),
                             lambda i: (0, 0)),                            # fused W (bf16)
                pl.BlockSpec((1, LANES), lambda i: (0, 0)),                # bias (f32)
            ],
            out_specs=pl.BlockSpec((tile4, LANES), lambda i: (i, 0)),
        ),
        compiler_params=pltpu.CompilerParams(
            dimension_semantics=("parallel",)),
    )(ids, head, w_full, bias)

    # unfold + drop padded packed rows (typically fuses into the consumer)
    return out.reshape(n_pad, rel)[:n]


# ------------------------------- JAX glue ------------------------------------
def get_emb(indexes, src_enc_data, src_enc_lengths):
    """Port of PSDRootEncoder.getEmb: per-batch gather from the packed src_enc."""
    offsets = [0]
    for l in src_enc_lengths[:-1]:
        offsets.append(offsets[-1] + l)
    flat_idx = jnp.concatenate(
        [jnp.asarray(idx, jnp.int32) + off for idx, off in zip(indexes, offsets)])
    head = jnp.take(src_enc_data, flat_idx, axis=0)
    lengths = [len(idx) for idx in indexes]
    return head, lengths


def psd_root_encoder_forward(params, packed_input, lengths, indexes,
                             src_enc_data, src_enc_lengths):
    """Forward pass of PSDRootEncoder (eval mode). Returns (root_emb, lengths)."""
    # NOTE: ids are assumed in [0, POS_VOCAB); out-of-range ids would silently
    # drop the pos contribution whereas nn.Embedding raises.
    pos_ids = packed_input[:, PSD_POS].astype(jnp.int32)
    head_emb, head_lengths = get_emb(indexes, src_enc_data, src_enc_lengths)
    assert head_lengths == list(lengths)
    root_emb = root_mlp(pos_ids, head_emb, params["pos_lut"],
                        params["w_pos"], params["w_head"], params["b"])
    return root_emb, lengths


# ------------------------------- demo / test ----------------------------------
def make_params(key):
    k1, k2, k3 = jax.random.split(key, 3)
    input_size = POS_EMB_DIM + ROOT_SRC_ENC_SIZE
    # nn.Linear(input_size, REL_DIM): weight (REL_DIM, input_size); keep it
    # transposed and split into the pos / head halves of the concat.
    w_full = jax.random.normal(k1, (input_size, REL_DIM), jnp.float32) * 0.1
    return {
        "pos_lut": jax.random.normal(k2, (POS_VOCAB, POS_EMB_DIM), jnp.float32) * 0.1,
        "w_pos": w_full[:POS_EMB_DIM],
        "w_head": w_full[POS_EMB_DIM:],
        "b": jax.random.normal(k3, (1, REL_DIM), jnp.float32) * 0.1,
    }


def _reference(params, packed_input, indexes, src_enc_data, src_enc_lengths):
    pos_emb = jnp.take(params["pos_lut"], packed_input[:, PSD_POS], axis=0)
    head, _ = get_emb(indexes, src_enc_data, src_enc_lengths)
    full_in = jnp.concatenate([pos_emb, head], axis=1)
    w_full = jnp.concatenate([params["w_pos"], params["w_head"]], axis=0)
    return jnp.maximum(full_in @ w_full + params["b"], 0.0)


def _run_case(params, key, lengths, src_enc_lengths, n_features=5):
    k_in, k_src, k_idx = jax.random.split(key, 3)
    n_packed = sum(lengths)
    packed_input = jax.random.randint(k_in, (n_packed, n_features), 0, POS_VOCAB,
                                      dtype=jnp.int32)
    src_enc_data = jax.random.normal(
        k_src, (sum(src_enc_lengths), ROOT_SRC_ENC_SIZE), jnp.float32)
    idx_keys = jax.random.split(k_idx, len(lengths))
    indexes = [jax.random.randint(idx_keys[i], (lengths[i],), 0, src_enc_lengths[i],
                                  dtype=jnp.int32)
               for i in range(len(lengths))]

    root_emb, out_lengths = psd_root_encoder_forward(
        params, packed_input, lengths, indexes, src_enc_data, src_enc_lengths)
    root_emb = jax.block_until_ready(root_emb)

    ref = _reference(params, packed_input, indexes, src_enc_data, src_enc_lengths)
    assert root_emb.shape == (n_packed, REL_DIM)
    assert out_lengths == lengths
    # bf16 MXU operands with f32 accumulation and exact f32 bias -> relaxed tol.
    assert jnp.allclose(root_emb, ref, atol=2e-2, rtol=2e-2), \
        float(jnp.max(jnp.abs(root_emb - ref)))


if __name__ == "__main__":
    key = jax.random.PRNGKey(0)
    k_params, k_case1, k_case2, k_case3 = jax.random.split(key, 4)
    params = make_params(k_params)

    # Case 1: small batch (2 sentences, gold AMR lengths [8, 6] -> N_packed = 14).
    _run_case(params, k_case1, lengths=[8, 6], src_enc_lengths=[10, 9])

    # Case 2: medium packed batch (single lane-dense row tile).
    _run_case(params, k_case2, lengths=[300, 220], src_enc_lengths=[310, 240])

    # Case 3: larger packed batch -> multiple (even) grid steps, bounded padding.
    _run_case(params, k_case3, lengths=[2600, 2500], src_enc_lengths=[2610, 2520])

    print("KERNEL_OK")
</pallas_src>

<mosaic_0001>
module attributes {stable_mosaic.version = 11 : i64} {
  func.func @_root_kernel(%arg0: i32, %arg1: memref<8x4xi32, #tpu.memory_space<vmem>>, %arg2: memref<8x128xf32, #tpu.memory_space<vmem>>, %arg3: memref<256x128xbf16, #tpu.memory_space<vmem>>, %arg4: memref<1x128xf32, #tpu.memory_space<vmem>>, %arg5: memref<8x128xf32, #tpu.memory_space<vmem>>) attributes {dimension_semantics = [#tpu.dimension_semantics<parallel>], iteration_bounds = array<i64: 1>, scalar_prefetch = 0 : i64, scratch_operands = 0 : i64, tpu.core_type = #tpu.core_type<tc>, window_params = [{transform_indices = @transform_0, window_bounds = array<i64: 8, 4>}, {transform_indices = @transform_1, window_bounds = array<i64: 8, 128>}, {pipeline_mode = #tpu.pipeline_mode<synchronous>, transform_indices = @transform_2, window_bounds = array<i64: 256, 128>}, {pipeline_mode = #tpu.pipeline_mode<synchronous>, transform_indices = @transform_3, window_bounds = array<i64: 1, 128>}, {transform_indices = @transform_4, window_bounds = array<i64: 8, 128>}]} {
    %c0 = arith.constant 0 : index
    %c0_0 = arith.constant 0 : index
    %0 = vector.load %arg1[%c0, %c0_0] : memref<8x4xi32, #tpu.memory_space<vmem>>, vector<8x4xi32>
    %1 = tpu.iota {dimensions = array<i32: 1>} : vector<8x128xi32>
    %2 = vector.extract_strided_slice %0 {offsets = [0, 0], sizes = [8, 1], strides = [1, 1]} : vector<8x4xi32> to vector<8x1xi32>
    %3 = vector.broadcast %2 : vector<8x1xi32> to vector<8x128xi32>
    %4 = arith.cmpi eq, %1, %3 : vector<8x128xi32>
    %5 = vector.extract_strided_slice %0 {offsets = [0, 1], sizes = [8, 1], strides = [1, 1]} : vector<8x4xi32> to vector<8x1xi32>
    %c32_i32 = arith.constant 32 : i32
    %6 = vector.broadcast %c32_i32 : i32 to vector<8x1xi32>
    %7 = arith.addi %5, %6 : vector<8x1xi32>
    %8 = vector.broadcast %7 : vector<8x1xi32> to vector<8x128xi32>
    %9 = arith.cmpi eq, %1, %8 : vector<8x128xi32>
    %10 = arith.ori %4, %9 : vector<8x128xi1>
    %11 = vector.extract_strided_slice %0 {offsets = [0, 2], sizes = [8, 1], strides = [1, 1]} : vector<8x4xi32> to vector<8x1xi32>
    %c64_i32 = arith.constant 64 : i32
    %12 = vector.broadcast %c64_i32 : i32 to vector<8x1xi32>
    %13 = arith.addi %11, %12 : vector<8x1xi32>
    %14 = vector.broadcast %13 : vector<8x1xi32> to vector<8x128xi32>
    %15 = arith.cmpi eq, %1, %14 : vector<8x128xi32>
    %16 = arith.ori %10, %15 : vector<8x128xi1>
    %17 = vector.extract_strided_slice %0 {offsets = [0, 3], sizes = [8, 1], strides = [1, 1]} : vector<8x4xi32> to vector<8x1xi32>
    %c96_i32 = arith.constant 96 : i32
    %18 = vector.broadcast %c96_i32 : i32 to vector<8x1xi32>
    %19 = arith.addi %17, %18 : vector<8x1xi32>
    %20 = vector.broadcast %19 : vector<8x1xi32> to vector<8x128xi32>
    %21 = arith.cmpi eq, %1, %20 : vector<8x128xi32>
    %22 = arith.ori %16, %21 : vector<8x128xi1>
    %cst = arith.constant 1.000000e+00 : f32
    %cst_1 = arith.constant 0.000000e+00 : f32
    %23 = vector.broadcast %cst : f32 to vector<8x128xf32>
    %24 = vector.broadcast %cst_1 : f32 to vector<8x128xf32>
    %25 = arith.select %22, %23, %24 : vector<8x128xi1>, vector<8x128xf32>
    %26 = arith.truncf %25 : vector<8x128xf32> to vector<8x128xbf16>
    %c0_2 = arith.constant 0 : index
    %c0_3 = arith.constant 0 : index
    %27 = vector.load %arg2[%c0_2, %c0_3] : memref<8x128xf32, #tpu.memory_space<vmem>>, vector<8x128xf32>
    %28 = arith.truncf %27 : vector<8x128xf32> to vector<8x128xbf16>
    %29 = tpu.concatenate %26, %28 in 1 : vector<8x128xbf16>, vector<8x128xbf16> -> vector<8x256xbf16>
    %c0_4 = arith.constant 0 : index
    %c0_5 = arith.constant 0 : index
    %30 = vector.load %arg3[%c0_4, %c0_5] : memref<256x128xbf16, #tpu.memory_space<vmem>>, vector<256x128xbf16>
    %cst_6 = arith.constant dense<0.000000e+00> : vector<8x128xf32>
    %31 = tpu.matmul %29, %30, %cst_6 {dimension_numbers = #tpu.dot_dimension_numbers<[1], [0], [0], [1], [0, 0, 1, 1], [], []>} : vector<8x256xbf16>, vector<256x128xbf16>, vector<8x128xf32> -> vector<8x128xf32>
    %c0_7 = arith.constant 0 : index
    %c0_8 = arith.constant 0 : index
    %32 = vector.load %arg4[%c0_7, %c0_8] : memref<1x128xf32, #tpu.memory_space<vmem>>, vector<1x128xf32>
    %33 = vector.broadcast %32 : vector<1x128xf32> to vector<8x128xf32>
    %34 = arith.addf %31, %33 : vector<8x128xf32>
    %cst_9 = arith.constant 0.000000e+00 : f32
    %35 = vector.broadcast %cst_9 : f32 to vector<8x128xf32>
    %36 = arith.maximumf %34, %35 : vector<8x128xf32>
    %c0_10 = arith.constant 0 : index
    %c0_11 = arith.constant 0 : index
    %37 = vector.load %arg5[%c0_10, %c0_11] : memref<8x128xf32, #tpu.memory_space<vmem>>, vector<8x128xf32>
    tpu.vector_store %arg5[%c0_10, %c0_11], %36 {strides = array<i32>} : memref<8x128xf32, #tpu.memory_space<vmem>>, vector<8x128xf32>,
    return
  }
  func.func @transform_0(%arg0: i32) -> (i32, i32) {
    %c0_i32 = arith.constant 0 : i32
    %c0_i32_0 = arith.constant 0 : i32
    return %arg0, %c0_i32 : i32, i32
  }
  func.func @transform_1(%arg0: i32) -> (i32, i32) {
    %c0_i32 = arith.constant 0 : i32
    %c0_i32_0 = arith.constant 0 : i32
    return %arg0, %c0_i32 : i32, i32
  }
  func.func @transform_2(%arg0: i32) -> (i32, i32) {
    %c0_i32 = arith.constant 0 : i32
    %c0_i32_0 = arith.constant 0 : i32
    %c0_i32_1 = arith.constant 0 : i32
    return %c0_i32, %c0_i32_0 : i32, i32
  }
  func.func @transform_3(%arg0: i32) -> (i32, i32) {
    %c0_i32 = arith.constant 0 : i32
    %c0_i32_0 = arith.constant 0 : i32
    %c0_i32_1 = arith.constant 0 : i32
    return %c0_i32, %c0_i32_0 : i32, i32
  }
  func.func @transform_4(%arg0: i32) -> (i32, i32) {
    %c0_i32 = arith.constant 0 : i32
    %c0_i32_0 = arith.constant 0 : i32
    return %arg0, %c0_i32 : i32, i32
  }
}

</mosaic_0001>

<llo_original>
// kernel: root_mlp.1
$region0: #{root_mlp.1}
  #allocation0 [shape = 'u32[]', space=smem, size = 0x4, offset = 0x4, fixed_abs, tag = 'smem constant byte address 0x4 - core index']
  #allocation1 [shape = 'u32[72,128]{1,0:T(1,128)}', space=vmem, size = 0x9000, scoped, tag = 'internal scratch']
  %s0 = inlined_call_operand.vmem [shape: s32[8,4], index: 0, kind: input, shape index: {}]
  %s1 = inlined_call_operand.vmem [shape: f32[8,128], index: 1, kind: input, shape index: {}]
  %s2 = inlined_call_operand.vmem [shape: bf16[256,128], index: 2, kind: input, shape index: {}]
  %s3 = inlined_call_operand.vmem [shape: f32[1,128], index: 3, kind: input, shape index: {}]
  %s4 = inlined_call_operand.vmem [shape: f32[8,128], index: 4, kind: output, shape index: {}]
  %s5 = sld [smem:[#allocation0]]
  $region26: #{root_mlp.1} parent=0
    _
  %s7 = ssub.s32 1, %s5
  %s8 = scalar_select 0, %s7, %s5
  // Predicated region
  $region2: #{root_mlp.1} parent=0 // pred_check
    _
  $region3: #{root_mlp.1} parent=0 // pred_check_branch
    %10 = sbr.rel (0) target = $region5
  $region4: #{root_mlp.1} parent=0 // pred_region
    _
  $region5: #{root_mlp.1} parent=0 // pred_fallthru
    _
  // Predicated region
  $region6: #{root_mlp.1} parent=0 // pred_check
    _
  $region7: #{root_mlp.1} parent=0 // pred_check_branch
    %12 = sbr.rel (0) target = $region9
  $region8: #{root_mlp.1} parent=0 // pred_region
    _
  $region9: #{root_mlp.1} parent=0 // pred_fallthru
    _
  // Predicated region
  $region10: #{root_mlp.1} parent=0 // pred_check
    _
  $region11: #{root_mlp.1} parent=0 // pred_check_branch
    %14 = sbr.rel (0) target = $region13
  $region12: #{root_mlp.1} parent=0 // pred_region
    _
  $region13: #{root_mlp.1} parent=0 // pred_fallthru
    _
  // Predicated region
  $region14: #{root_mlp.1} parent=0 // pred_check
    _
  $region15: #{root_mlp.1} parent=0 // pred_check_branch
    %16 = sbr.rel (0) target = $region17
  $region16: #{root_mlp.1} parent=0 // pred_region
    _
  $region17: #{root_mlp.1} parent=0 // pred_fallthru
    _
  %v17 = vld [vmem:[%s0] sm:$0xff]
  %v18 = vlaneseq
  %v19 = vand.u32 %v18, 127
  %20 = vset.pattern.permute.xlu0 0
  %21 = vperm.xlu0 %20, %v17
  %v22 = vpop.permute.xlu0 %21
  %vm23 = vcmp.eq.s32.totalorder %v19, %v22
  %v24 = vadd.s32 %v17, 32
  %25 = vset.pattern.permute.xlu0 1
  %26 = vperm.xlu0 %25, %v24
  %v27 = vpop.permute.xlu0 %26
  %vm28 = vcmp.eq.s32.totalorder %v19, %v27
  %vm29 = vmor %vm23, %vm28
  %v30 = vadd.s32 %v17, 64
  %31 = vset.pattern.permute.xlu0 2
  %32 = vperm.xlu0 %31, %v30
  %v33 = vpop.permute.xlu0 %32
  %vm34 = vcmp.eq.s32.totalorder %v19, %v33
  %vm35 = vmor %vm29, %vm34
  %v36 = vadd.s32 %v17, 96
  %37 = vset.pattern.permute.xlu0 3
  %38 = vperm.xlu0 %37, %v36
  %v39 = vpop.permute.xlu0 %38
  %vm40 = vcmp.eq.s32.totalorder %v19, %v39
  %vm41 = vmor %vm35, %vm40
  %v42 = vsel %vm41, 1.0, 0.0
  %v43 = vpack.c.bf16 %v42, %v42
  %v44 = vld [vmem:[%s1] sm:$0xff]
  %v45 = vpack.c.bf16 %v44, %v44
  %v46 = vld [vmem:[%s2] sm:$0xf]
  %v47 = vld [vmem:[%s2 + $0x4] sm:$0xf]
  %v48 = vld [vmem:[%s2 + $0x8] sm:$0xf]
  %v49 = vld [vmem:[%s2 + $0xc] sm:$0xf]
  %v50 = vld [vmem:[%s2 + $0x10] sm:$0xf]
  %v51 = vld [vmem:[%s2 + $0x14] sm:$0xf]
  %v52 = vld [vmem:[%s2 + $0x18] sm:$0xf]
  %v53 = vld [vmem:[%s2 + $0x1c] sm:$0xf]
  %v54 = vld [vmem:[%s2 + $0x20] sm:$0xf]
  %v55 = vld [vmem:[%s2 + $0x24] sm:$0xf]
  %v56 = vld [vmem:[%s2 + $0x28] sm:$0xf]
  %v57 = vld [vmem:[%s2 + $0x2c] sm:$0xf]
  %v58 = vld [vmem:[%s2 + $0x30] sm:$0xf]
  %v59 = vld [vmem:[%s2 + $0x34] sm:$0xf]
  %v60 = vld [vmem:[%s2 + $0x38] sm:$0xf]
  %v61 = vld [vmem:[%s2 + $0x3c] sm:$0xf]
  %v62 = vld [vmem:[%s2 + $0x40] sm:$0xf]
  %v63 = vld [vmem:[%s2 + $0x44] sm:$0xf]
  %v64 = vld [vmem:[%s2 + $0x48] sm:$0xf]
  %v65 = vld [vmem:[%s2 + $0x4c] sm:$0xf]
  %v66 = vld [vmem:[%s2 + $0x50] sm:$0xf]
  %v67 = vld [vmem:[%s2 + $0x54] sm:$0xf]
  %v68 = vld [vmem:[%s2 + $0x58] sm:$0xf]
  %v69 = vld [vmem:[%s2 + $0x5c] sm:$0xf]
  %v70 = vld [vmem:[%s2 + $0x60] sm:$0xf]
  %v71 = vld [vmem:[%s2 + $0x64] sm:$0xf]
  %v72 = vld [vmem:[%s2 + $0x68] sm:$0xf]
  %v73 = vld [vmem:[%s2 + $0x6c] sm:$0xf]
  %v74 = vld [vmem:[%s2 + $0x70] sm:$0xf]
  %v75 = vld [vmem:[%s2 + $0x74] sm:$0xf]
  %v76 = vld [vmem:[%s2 + $0x78] sm:$0xf]
  %v77 = vld [vmem:[%s2 + $0x7c] sm:$0xf]
  %v78 = vld [vmem:[%s3] sm:$0x1]
  %v80 = vperm.slane %v78, 0
  %v114 = vunpack.c.l.b16 %v46
  %v115 = vunpack.c.l.b16 %v47
  %v116 = vunpack.c.l.b16 %v48
  %v117 = vunpack.c.l.b16 %v49
  %v118 = vunpack.c.l.b16 %v50
  %v119 = vunpack.c.l.b16 %v51
  %v120 = vunpack.c.l.b16 %v52
  %v121 = vunpack.c.l.b16 %v53
  %v122 = vunpack.c.l.b16 %v54
  %v123 = vunpack.c.l.b16 %v55
  %v124 = vunpack.c.l.b16 %v56
  %v125 = vunpack.c.l.b16 %v57
  %v126 = vunpack.c.l.b16 %v58
  %v127 = vunpack.c.l.b16 %v59
  %v128 = vunpack.c.l.b16 %v60
  %v129 = vunpack.c.l.b16 %v61
  %v130 = vunpack.c.l.b16 %v62
  %v131 = vunpack.c.l.b16 %v63
  %v132 = vunpack.c.l.b16 %v64
  %v133 = vunpack.c.l.b16 %v65
  %v134 = vunpack.c.l.b16 %v66
  %v135 = vunpack.c.l.b16 %v67
  %v136 = vunpack.c.l.b16 %v68
  %v137 = vunpack.c.l.b16 %v69
  %v138 = vunpack.c.l.b16 %v70
  %v139 = vunpack.c.l.b16 %v71
  %v140 = vunpack.c.l.b16 %v72
  %v141 = vunpack.c.l.b16 %v73
  %v142 = vunpack.c.l.b16 %v74
  %v143 = vunpack.c.l.b16 %v75
  %v144 = vunpack.c.l.b16 %v76
  %v145 = vunpack.c.l.b16 %v77
  %v146 = vpack.c.b16 %v115, %v114
  %v147 = vpack.c.b16 %v117, %v116
  %v148 = vpack.c.b16 %v119, %v118
  %v149 = vpack.c.b16 %v121, %v120
  %v150 = vpack.c.b16 %v123, %v122
  %v151 = vpack.c.b16 %v125, %v124
  %v152 = vpack.c.b16 %v127, %v126
  %v153 = vpack.c.b16 %v129, %v128
  %v154 = vpack.c.b16 %v131, %v130
  %v155 = vpack.c.b16 %v133, %v132
  %v156 = vpack.c.b16 %v135, %v134
  %v157 = vpack.c.b16 %v137, %v136
  %v158 = vpack.c.b16 %v139, %v138
  %v159 = vpack.c.b16 %v141, %v140
  %v160 = vpack.c.b16 %v143, %v142
  %v161 = vpack.c.b16 %v145, %v144
  %178 = vmatpush.bf16.msra.mxu0 %v153
  %179 = vmatpush.bf16.msra.mxu0 %v152
  %180 = vmatpush.bf16.msra.mxu0 %v151
  %181 = vmatpush.bf16.msra.mxu0 %v150
  %182 = vmatpush.bf16.msra.mxu0 %v149
  %183 = vmatpush.bf16.msra.mxu0 %v148
  %184 = vmatpush.bf16.msra.mxu0 %v147
  %185 = vmatpush.bf16.msra.mxu0 %v146
  %186 = vmatmul.bf16.gmra.mxu0 %v43
  %v187 = vpop.f32.mrf.mxu0
  %v188 = vadd.f32 %v80, %v187
  %v189 = vpop.f32.mrf.mxu0
  %190 = vdwg.mxu0
  %191 = vmatpush.bf16.msra.mxu0 %v161
  %192 = vmatpush.bf16.msra.mxu0 %v160
  %193 = vmatpush.bf16.msra.mxu0 %v159
  %194 = vmatpush.bf16.msra.mxu0 %v158
  %195 = vmatpush.bf16.msra.mxu0 %v157
  %196 = vmatpush.bf16.msra.mxu0 %v156
  %197 = vmatpush.bf16.msra.mxu0 %v155
  %198 = vmatpush.bf16.msra.mxu0 %v154
  %199 = vmatmul.bf16.gmra.mxu0 %v45
  %v200 = vpop.f32.mrf.mxu0
  %v201 = vadd.f32 %v188, %v200
  %v202 = vpop.f32.mrf.mxu0
  %203 = vdwg.mxu0
  %v204 = vmax.f32 %v201, 0.0
  %205 = vst [vmem:[%s4] sm:$0xff] %v204
  // Predicated region
  $region18: #{root_mlp.1} parent=0 // pred_check
    _
  $region19: #{root_mlp.1} parent=0 // pred_check_branch
    %207 = sbr.rel (0) target = $region21
  $region20: #{root_mlp.1} parent=0 // pred_region
    _
  $region21: #{root_mlp.1} parent=0 // pred_fallthru
    _
  // Predicated region
  $region22: #{root_mlp.1} parent=0 // pred_check
    _
  $region23: #{root_mlp.1} parent=0 // pred_check_branch
    %209 = sbr.rel (0) target = $region25
  $region24: #{root_mlp.1} parent=0 // pred_region
    _
  $region25: #{root_mlp.1} parent=0 // pred_fallthru
    _

</llo_original>
